<compile_context>
chip_gen: v5e
topology: v5e:2x2
jax: 0.10.0
libtpu: 0.0.40
codegen_flags: <defaults>
</compile_context>

<pallas_src>
import jax
import jax.numpy as jnp
from jax.experimental import pallas as pl
from jax.experimental.pallas import tpu as pltpu


def _awq_scaler_kernel(x_ref, scale_ref, o_ref):
    # Exact (non-approx) reciprocals to preserve divide-level accuracy, then a
    # broadcast multiply across the (tm, d_tile) tile.
    inv = 1.0 / scale_ref[...]
    x = x_ref[...].astype(jnp.float32)
    o_ref[...] = (x * inv).astype(o_ref.dtype)


def awq_scaler(
    x: jax.Array,
    scale: jax.Array,
    *,
    block_byte_budget: int = 24 * 1024 * 1024,
    max_lane_tile: int = 8192,
    max_row_tile: int = 4096,
) -> jax.Array:
    """Apply AWQ scaling: x / scale over the last dim, preserving x.dtype."""
    assert scale.ndim == 1 and x.shape[-1] == scale.shape[0]
    orig_shape = x.shape
    orig_dtype = x.dtype
    d = x.shape[-1]

    rows = 1
    for s in orig_shape[:-1]:
        rows *= s
    x2 = x.reshape(rows, d)                          # contiguous collapse: free
    scale_f32 = scale.astype(jnp.float32)

    # --- Lane-dense layout: fold rows into lanes when hidden dim < 128 -------
    fold = 128 // d if (d < 128 and 128 % d == 0) else 1
    rows_f = rows
    if fold > 1:
        rows_f = pl.cdiv(rows, fold) * fold
        if rows_f != rows:                           # rare: pad to a fold multiple
            x2 = jnp.pad(x2, ((0, rows_f - rows), (0, 0)))
        x2 = x2.reshape(rows_f // fold, d * fold)    # contiguous reshape: free
        scale_f32 = jnp.tile(scale_f32, (fold,))

    r_eff, d_eff = x2.shape
    scale2 = scale_f32.reshape(1, d_eff)

    # --- Lane tile: multiple of 128 dividing d_eff (capped), else full dim ---
    if d_eff % 128 == 0:
        d_tile = min(d_eff, max_lane_tile)
        while d_eff % d_tile != 0:
            d_tile -= 128
    else:
        d_tile = d_eff                               # small / irregular hidden dim

    # --- Row tile from a VMEM budget ------------------------------------------
    # Per-element VMEM: double-buffered input + output (itemsize each) plus
    # ~8 B of f32 intermediates that Mosaic may spill to VMEM for large blocks.
    itemsize = jnp.dtype(orig_dtype).itemsize
    sub = max(8, 32 // itemsize)                     # sublane pack: 8 f32 / 16 bf16 / 32 i8
    bytes_per_row = d_tile * (4 * itemsize + 8)
    tm = max(sub, (block_byte_budget // bytes_per_row) // sub * sub)
    tm = min(tm, max_row_tile)
    if tm >= r_eff:
        tm = r_eff                                   # single (full-dim) row block

    # Partial last row block is handled by Pallas (padded reads, masked
    # writebacks) -> no extra jnp.pad / slice HBM passes in the common case.
    grid = (pl.cdiv(r_eff, tm), d_eff // d_tile)

    out = pl.pallas_call(
        _awq_scaler_kernel,
        out_shape=jax.ShapeDtypeStruct((r_eff, d_eff), orig_dtype),
        grid_spec=pltpu.PrefetchScalarGridSpec(
            num_scalar_prefetch=0,
            grid=grid,
            in_specs=[
                pl.BlockSpec((tm, d_tile), lambda i, j: (i, j)),   # x tile
                pl.BlockSpec((1, d_tile), lambda i, j: (0, j)),    # scale slice
            ],
            out_specs=pl.BlockSpec((tm, d_tile), lambda i, j: (i, j)),
        ),
        compiler_params=pltpu.CompilerParams(
            dimension_semantics=("parallel", "parallel"),
            vmem_limit_bytes=32 * 1024 * 1024,
        ),
    )(x2, scale2)

    if fold > 1:
        out = out.reshape(rows_f, d)
        if rows_f != rows:
            out = out[:rows]
    return out.reshape(orig_shape)


if __name__ == "__main__":
    key = jax.random.PRNGKey(0)

    # --- Case 1: module-sized toy shape (f32), hidden < 128 -> lane folding --
    batch, seq, in_dim = 2, 8, 32
    x = jax.random.normal(key, (batch, seq, in_dim), dtype=jnp.float32)
    scale = jnp.ones((in_dim,), dtype=jnp.float32) + 0.1 * jnp.arange(
        in_dim, dtype=jnp.float32
    )
    out = jax.block_until_ready(awq_scaler(x, scale))
    ref = (x / scale.reshape(1, 1, -1)).astype(x.dtype)
    assert out.shape == x.shape and out.dtype == x.dtype
    assert jnp.allclose(out, ref, rtol=2e-6, atol=2e-6)

    # --- Case 2: rows not divisible by the tile, hidden multiple of 128 ------
    k2 = jax.random.PRNGKey(0)
    x2 = jax.random.normal(k2, (2, 7, 256), dtype=jnp.float32)
    s2 = 1.0 + 0.05 * jnp.arange(256, dtype=jnp.float32)
    out2 = jax.block_until_ready(awq_scaler(x2, s2))
    ref2 = (x2 / s2.reshape(1, 1, -1)).astype(x2.dtype)
    assert out2.shape == x2.shape and out2.dtype == x2.dtype
    assert jnp.allclose(out2, ref2, rtol=2e-6, atol=2e-6)

    # --- Case 2b: force a multi-block grid with a ragged last row block ------
    out2b = jax.block_until_ready(awq_scaler(x2, s2, max_row_tile=8))
    assert jnp.allclose(out2b, ref2, rtol=2e-6, atol=2e-6)

    # --- Case 3: bf16 activations (16-sublane tiling, f32 internal math) -----
    x3 = jax.random.normal(k2, (2, 8, 128), dtype=jnp.bfloat16)
    s3 = 1.0 + 0.1 * jnp.arange(128, dtype=jnp.float32)
    out3 = jax.block_until_ready(awq_scaler(x3, s3))
    ref3 = (x3.astype(jnp.float32) / s3.reshape(1, 1, -1)).astype(jnp.bfloat16)
    assert out3.shape == x3.shape and out3.dtype == x3.dtype
    assert jnp.allclose(
        out3.astype(jnp.float32), ref3.astype(jnp.float32), rtol=2e-2, atol=2e-2
    )

    # --- Case 4: fold path with rows NOT divisible by the fold factor --------
    x4 = jax.random.normal(k2, (1, 7, 32), dtype=jnp.float32)
    s4 = 1.0 + 0.02 * jnp.arange(32, dtype=jnp.float32)
    out4 = jax.block_until_ready(awq_scaler(x4, s4))
    ref4 = (x4 / s4.reshape(1, 1, -1)).astype(x4.dtype)
    assert out4.shape == x4.shape and out4.dtype == x4.dtype
    assert jnp.allclose(out4, ref4, rtol=2e-6, atol=2e-6)

    print("KERNEL_OK")
</pallas_src>

<mosaic_0001>
module attributes {stable_mosaic.version = 11 : i64} {
  func.func @_awq_scaler_kernel(%arg0: i32, %arg1: i32, %arg2: memref<4x128xf32, #tpu.memory_space<vmem>>, %arg3: memref<1x128xf32, #tpu.memory_space<vmem>>, %arg4: memref<4x128xf32, #tpu.memory_space<vmem>>) attributes {dimension_semantics = [#tpu.dimension_semantics<parallel>, #tpu.dimension_semantics<parallel>], iteration_bounds = array<i64: 1, 1>, scalar_prefetch = 0 : i64, scratch_operands = 0 : i64, tpu.core_type = #tpu.core_type<tc>, window_params = [{transform_indices = @transform_0, window_bounds = array<i64: 4, 128>}, {transform_indices = @transform_1, window_bounds = array<i64: 1, 128>}, {transform_indices = @transform_2, window_bounds = array<i64: 4, 128>}]} {
    %c0 = arith.constant 0 : index
    %c0_0 = arith.constant 0 : index
    %0 = vector.load %arg3[%c0, %c0_0] : memref<1x128xf32, #tpu.memory_space<vmem>>, vector<1x128xf32>
    %cst = arith.constant 1.000000e+00 : f32
    %1 = vector.broadcast %cst : f32 to vector<1x128xf32>
    %2 = arith.divf %1, %0 : vector<1x128xf32>
    %c0_1 = arith.constant 0 : index
    %c0_2 = arith.constant 0 : index
    %3 = vector.load %arg2[%c0_1, %c0_2] : memref<4x128xf32, #tpu.memory_space<vmem>>, vector<4x128xf32>
    %4 = vector.broadcast %2 : vector<1x128xf32> to vector<4x128xf32>
    %5 = arith.mulf %3, %4 : vector<4x128xf32>
    %c0_3 = arith.constant 0 : index
    %c0_4 = arith.constant 0 : index
    %6 = vector.load %arg4[%c0_3, %c0_4] : memref<4x128xf32, #tpu.memory_space<vmem>>, vector<4x128xf32>
    tpu.vector_store %arg4[%c0_3, %c0_4], %5 {strides = array<i32>} : memref<4x128xf32, #tpu.memory_space<vmem>>, vector<4x128xf32>,
    return
  }
  func.func @transform_0(%arg0: i32, %arg1: i32) -> (i32, i32) {
    %c0_i32 = arith.constant 0 : i32
    return %arg0, %arg1 : i32, i32
  }
  func.func @transform_1(%arg0: i32, %arg1: i32) -> (i32, i32) {
    %c0_i32 = arith.constant 0 : i32
    %c0_i32_0 = arith.constant 0 : i32
    return %c0_i32, %arg1 : i32, i32
  }
  func.func @transform_2(%arg0: i32, %arg1: i32) -> (i32, i32) {
    %c0_i32 = arith.constant 0 : i32
    return %arg0, %arg1 : i32, i32
  }
}

</mosaic_0001>

<llo_original>
// kernel: tpu_custom_call.1
$region0: #{tpu_custom_call.1}
  #allocation0 [shape = 'u32[]', space=smem, size = 0x4, offset = 0x4, fixed_abs, tag = 'smem constant byte address 0x4 - core index']
  #allocation1 [shape = 'u32[72,128]{1,0:T(1,128)}', space=vmem, size = 0x9000, scoped, tag = 'internal scratch']
  %s0 = inlined_call_operand.hbm [shape: f32[4,128], index: 0, kind: input, shape index: {}]
  %s1 = inlined_call_operand.hbm [shape: f32[1,128], index: 1, kind: input, shape index: {}]
  %s2 = inlined_call_operand.hbm [shape: f32[4,128], index: 2, kind: output, shape index: {}]
  %s3 = sld [smem:[#allocation0]]
  $region26: #{tpu_custom_call.1} parent=0
    _
  %s5 = ssub.s32 1, %s3
  %s6 = scalar_select 0, %s5, %s3
  $region1: #{tpu_custom_call.1} parent=0
    #allocation2 [shape = 'u8[2048]{0}', space=vmem, size = 0x800, scoped, tag = 'input window, operand 0, single buffered']
    #allocation3 [shape = 's32[1]{0}', space=sflag, size = 0x4, scoped, tag = 'scoped memory for tpu_custom_call.1']
    #allocation4 [shape = 's32[1]{0}', space=sflag, size = 0x4, scoped, tag = 'scoped memory for tpu_custom_call.1']
    #allocation5 [shape = 'u8[512]{0}', space=vmem, size = 0x400, scoped, tag = 'input window, operand 1, single buffered']
    #allocation6 [shape = 's32[1]{0}', space=sflag, size = 0x4, scoped, tag = 'scoped memory for tpu_custom_call.1']
    #allocation7 [shape = 'u8[2048]{0}', space=vmem, size = 0x800, scoped, tag = 'output window, operand 0, single buffered']
    %7 = vsyncpa [#allocation3], 0
    %8 = vsyncpa [#allocation6], 0
    %9 = vsyncpa [#allocation4], 0
    // Predicated region
    $region2: #{tpu_custom_call.1} parent=1 // pred_check
      _
    $region3: #{tpu_custom_call.1} parent=1 // pred_check_branch
      %11 = sbr.rel (0) target = $region5
    $region4: #{tpu_custom_call.1} parent=1 // pred_region
      %13 = vsyncadd [#allocation3], 0
      %s15 = sshll.u32 %s0, 4
      %s16 = int_to_ptr.hbm [resolvable:$true] %s15
      %s17 = sshll.u32 [#allocation2], 4
      %s18 = int_to_ptr.vmem [resolvable:$true] %s17
      %20 = dma.hbm_to_vmem [thread:$0]  %s16, 64, %s18, [#allocation3]
    $region5: #{tpu_custom_call.1} parent=1 // pred_fallthru
      _
    // Predicated region
    $region6: #{tpu_custom_call.1} parent=1 // pred_check
      _
    $region7: #{tpu_custom_call.1} parent=1 // pred_check_branch
      %22 = sbr.rel (0) target = $region9
    $region8: #{tpu_custom_call.1} parent=1 // pred_region
      %24 = vsyncadd [#allocation6], 0
      %s26 = sshll.u32 %s1, 4
      %s27 = int_to_ptr.hbm [resolvable:$true] %s26
      %s28 = sshll.u32 [#allocation5], 4
      %s29 = int_to_ptr.vmem [resolvable:$true] %s28
      %31 = dma.hbm_to_vmem [thread:$0]  %s27, 16, %s29, [#allocation6]
    $region9: #{tpu_custom_call.1} parent=1 // pred_fallthru
      _
    // Predicated region
    $region10: #{tpu_custom_call.1} parent=1 // pred_check
      _
    $region11: #{tpu_custom_call.1} parent=1 // pred_check_branch
      %33 = sbr.rel (0) target = $region13
    $region12: #{tpu_custom_call.1} parent=1 // pred_region
      %35 = dma.done [#allocation3], 64
    $region13: #{tpu_custom_call.1} parent=1 // pred_fallthru
      _
    // Predicated region
    $region14: #{tpu_custom_call.1} parent=1 // pred_check
      _
    $region15: #{tpu_custom_call.1} parent=1 // pred_check_branch
      %37 = sbr.rel (0) target = $region17
    $region16: #{tpu_custom_call.1} parent=1 // pred_region
      %39 = dma.done [#allocation6], 16
    $region17: #{tpu_custom_call.1} parent=1 // pred_fallthru
      _
    %v40 = vld [vmem:[#allocation5] sm:$0x1]
    %v41 = vrcp.pop %v40
    %v42 = vmul.f32 %v40, %v41
    %v43 = vsub.f32 1.0, %v42
    %v44 = vmul.f32 %v41, %v43
    %v45 = vadd.f32 %v41, %v44
    %vm46 = vweird.f32 %v40
    %vm47 = vweird.f32 %v41
    %vm48 = vmor %vm46, %vm47
    %v49 = vsel %vm48, %v41, %v45
    %v50 = vand.u32 2147483647, %v40
    %vm51 = vcmp.eq.f32.partialorder %v50, 8.507059e+37
    %v52 = vand.u32 %v40, 2147483648
    %v53 = vor.u32 1.1754944e-38, %v52
    %v54 = vsel %vm51, %v53, %v49
    %v55 = vmul.f32 1.0, %v54
    %v56 = vld [vmem:[#allocation2] sm:$0xf]
    %v58 = vperm.slane %v55, 0
    %v60 = vmul.f32 %v56, %v58
    %61 = vst [vmem:[#allocation7] sm:$0xf] %v60
    // Predicated region
    $region18: #{tpu_custom_call.1} parent=1 // pred_check
      _
    $region19: #{tpu_custom_call.1} parent=1 // pred_check_branch
      %63 = sbr.rel (0) target = $region21
    $region20: #{tpu_custom_call.1} parent=1 // pred_region
      %65 = vsyncadd [#allocation4], 0
      %s67 = sshll.u32 [#allocation7], 4
      %s68 = int_to_ptr.vmem [resolvable:$true] %s67
      %s69 = sshll.u32 %s2, 4
      %s70 = int_to_ptr.hbm [resolvable:$true] %s69
      %72 = dma.vmem_to_hbm [thread:$0]  %s68, 64, %s70, [#allocation4]
    $region21: #{tpu_custom_call.1} parent=1 // pred_fallthru
      _
    // Predicated region
    $region22: #{tpu_custom_call.1} parent=1 // pred_check
      _
    $region23: #{tpu_custom_call.1} parent=1 // pred_check_branch
      %74 = sbr.rel (0) target = $region25
    $region24: #{tpu_custom_call.1} parent=1 // pred_region
      %76 = dma.done [#allocation4], 64
    $region25: #{tpu_custom_call.1} parent=1 // pred_fallthru
      _
    %77 = vsyncpa [#allocation3], 1
    %78 = vsyncpa [#allocation6], 1
    %79 = vsyncpa [#allocation4], 1

</llo_original>
